<compile_context>
chip_gen: v5e
topology: v5e:2x2
jax: 0.10.0
libtpu: 0.0.40
codegen_flags: <defaults>
</compile_context>

<pallas_src>
import functools
import math

import jax
import jax.numpy as jnp
from jax.experimental import pallas as pl
from jax.experimental.pallas import tpu as pltpu


def _round_up(x, m):
    return (x + m - 1) // m * m


def _pad_to(arr, target_shape):
    pads = [(0, t - s) for s, t in zip(arr.shape, target_shape)]
    if any(p for _, p in pads):
        return jnp.pad(arr, pads)
    return arr


def _gcn_xw_kernel(x_ref, adj_ref, w_ref, b_ref, o_ref, acc_ref, sup_ref, *,
                   compute_dtype):
    """out[b] = adj[b] @ (x[b] @ W) + bias   (used when D_out <= D_in)."""
    i = pl.program_id(1)          # output row tile within the batch
    k = pl.program_id(2)          # contraction tile over nodes
    tk = adj_ref.shape[2]

    @pl.when(k == 0)
    def _zero_acc():
        acc_ref[...] = jnp.zeros_like(acc_ref)

    row0 = pl.multiple_of(k * tk, tk)

    # Build the (N, D_out) support cache once per batch (first row tile only);
    # later row tiles reuse it and only stream adjacency tiles from HBM.
    @pl.when(i == 0)
    def _build_support():
        sup_ref[pl.ds(row0, tk), :] = jnp.dot(
            x_ref[0], w_ref[...], preferred_element_type=jnp.float32
        ).astype(sup_ref.dtype)

    a = adj_ref[0].astype(compute_dtype)
    acc_ref[...] += jnp.dot(a, sup_ref[pl.ds(row0, tk), :],
                            preferred_element_type=jnp.float32)

    @pl.when(k == pl.num_programs(2) - 1)
    def _finalize():
        # bias add / epilogue kept in f32 (VPU-friendly on all generations).
        o_ref[0] = (acc_ref[...] + b_ref[...]).astype(o_ref.dtype)


def _gcn_ax_kernel(x_ref, adj_ref, w_ref, b_ref, o_ref, acc_ref, xc_ref, *,
                   compute_dtype):
    """out[b] = (adj[b] @ x[b]) @ W + bias   (used when D_out > D_in)."""
    i = pl.program_id(1)
    k = pl.program_id(2)
    tk = adj_ref.shape[2]

    @pl.when(k == 0)
    def _zero_acc():
        acc_ref[...] = jnp.zeros_like(acc_ref)

    row0 = pl.multiple_of(k * tk, tk)

    # Cache X once per batch so later row tiles don't re-stream it from HBM.
    @pl.when(i == 0)
    def _cache_x():
        xc_ref[pl.ds(row0, tk), :] = x_ref[0]

    a = adj_ref[0].astype(compute_dtype)
    acc_ref[...] += jnp.dot(a, xc_ref[pl.ds(row0, tk), :],
                            preferred_element_type=jnp.float32)

    @pl.when(k == pl.num_programs(2) - 1)
    def _finalize():
        h = acc_ref[...].astype(compute_dtype)
        out = jnp.dot(h, w_ref[...], preferred_element_type=jnp.float32)
        o_ref[0] = (out + b_ref[...]).astype(o_ref.dtype)


def graph_convolution(input_feature, adjacency, weight, bias=None, *,
                      block_m=128, block_k=128, compute_dtype=None):
    """Pallas GraphConvolution forward.

    input_feature: (B, N, D_in), adjacency: (B, N, N),
    weight: (D_in, D_out), bias: (D_out,) or None.
    Returns (B, N, D_out) in input_feature.dtype.

    block_m / block_k: adjacency row / contraction tile sizes
      (block_m % 8 == 0, block_k % 128 == 0). 128 is a good v5e default;
      use 256 on v6e/v7x for large graphs.
    compute_dtype: dtype of the matmul operands (e.g. jnp.bfloat16 on
      v6e/v7x). Accumulation and the bias epilogue stay in float32.
    """
    if block_m % 8 != 0 or block_k % 128 != 0:
        raise ValueError("block_m must be a multiple of 8, block_k of 128")

    B, N, D_in = input_feature.shape
    D_out = weight.shape[1]
    out_dtype = input_feature.dtype
    cdt = jnp.dtype(compute_dtype) if compute_dtype is not None else jnp.dtype(out_dtype)

    # Don't over-tile small graphs.
    block_m = min(block_m, _round_up(N, 8))
    block_k = min(block_k, _round_up(N, 128))

    # Independent padding for adjacency rows vs contraction columns plus
    # lane-dense (multiple-of-128) feature dims. Zero padding keeps the math
    # exact; the result is sliced back at the end.
    n_rows_p = _round_up(N, block_m)
    n_cols_p = _round_up(N, block_k)
    d_in_p = _round_up(D_in, 128)
    d_out_p = _round_up(D_out, 128)

    x_p = _pad_to(input_feature, (B, n_cols_p, d_in_p)).astype(cdt)
    # Adjacency stays in its original dtype (no extra HBM cast pass on the
    # largest tensor); tiles are cast in-kernel if compute_dtype differs.
    adj_p = _pad_to(adjacency, (B, n_rows_p, n_cols_p))
    w_p = _pad_to(weight, (d_in_p, d_out_p)).astype(cdt)
    if bias is None:
        b_p = jnp.zeros((1, d_out_p), jnp.float32)
    else:
        b_p = _pad_to(bias.reshape(1, D_out), (1, d_out_p)).astype(jnp.float32)

    grid = (B, n_rows_p // block_m, n_cols_p // block_k)

    in_specs = [
        # X is only consumed on the first row tile of each batch (cache build).
        # Freezing its block index at (b, 0, 0) for i > 0 avoids re-fetching
        # X from HBM on every row tile.
        pl.BlockSpec((1, block_k, d_in_p),
                     lambda b, i, k: (b, jnp.where(i == 0, k, 0), 0)),
        pl.BlockSpec((1, block_m, block_k), lambda b, i, k: (b, i, k)),  # A
        pl.BlockSpec((d_in_p, d_out_p), lambda b, i, k: (0, 0)),         # W (resident)
        pl.BlockSpec((1, d_out_p), lambda b, i, k: (0, 0)),              # bias (resident)
    ]
    out_specs = pl.BlockSpec((1, block_m, d_out_p), lambda b, i, k: (b, i, 0))

    c_item = cdt.itemsize
    a_item = jnp.dtype(adj_p.dtype).itemsize
    o_item = jnp.dtype(out_dtype).itemsize

    # Matmul association: N^2*D_out + N*D_in*D_out  vs  N^2*D_in + N*D_in*D_out.
    ax_first = d_out_p > d_in_p
    if ax_first:
        kernel = functools.partial(_gcn_ax_kernel, compute_dtype=cdt)
        d_acc, d_cache = d_in_p, d_in_p
        flops = 2 * B * (n_rows_p * n_cols_p * d_in_p + n_rows_p * d_in_p * d_out_p)
    else:
        kernel = functools.partial(_gcn_xw_kernel, compute_dtype=cdt)
        d_acc, d_cache = d_out_p, d_out_p
        flops = 2 * B * (n_rows_p * n_cols_p * d_out_p + n_cols_p * d_in_p * d_out_p)

    scratch = [
        pltpu.VMEM((block_m, d_acc), jnp.float32),   # per-row-tile accumulator
        pltpu.VMEM((n_cols_p, d_cache), cdt),        # per-batch cache (support or X)
    ]
    # TODO(synk): for very large graphs (n_cols_p * d_cache close to VMEM
    # capacity) fall back to streaming the cached operand instead of caching.

    # Batch axis megacore-parallel; row-tile axis sequential (cache is built
    # on the first row tile of each batch); k is the reduction axis.
    dim_sem = ("parallel", "arbitrary", "arbitrary")

    bytes_accessed = (x_p.size * c_item + adj_p.size * a_item
                      + w_p.size * c_item + b_p.size * 4
                      + B * n_rows_p * d_out_p * o_item)

    # Explicit scoped-VMEM budget: 2 pipeline buffers per in/out block plus
    # scratch, with headroom; clamped to stay within v7x's 64 MiB VMEM.
    vmem_needed = (
        2 * block_k * d_in_p * c_item          # X blocks
        + 2 * block_m * block_k * a_item       # A blocks
        + 2 * d_in_p * d_out_p * c_item        # W
        + 2 * d_out_p * 4                      # bias
        + 2 * block_m * d_out_p * o_item       # output blocks
        + block_m * d_acc * 4                  # accumulator
        + n_cols_p * d_cache * c_item          # per-batch cache
    )
    vmem_limit = int(min(max(2 * vmem_needed, 32 * 1024 * 1024),
                         64 * 1024 * 1024))

    out_p = pl.pallas_call(
        kernel,
        out_shape=jax.ShapeDtypeStruct((B, n_rows_p, d_out_p), out_dtype),
        grid_spec=pltpu.PrefetchScalarGridSpec(
            num_scalar_prefetch=0,
            grid=grid,
            in_specs=in_specs,
            out_specs=out_specs,
            scratch_shapes=scratch,
        ),
        compiler_params=pltpu.CompilerParams(
            dimension_semantics=dim_sem,
            vmem_limit_bytes=vmem_limit,
        ),
        cost_estimate=pl.CostEstimate(
            flops=flops, transcendentals=0, bytes_accessed=bytes_accessed),
    )(x_p, adj_p, w_p, b_p)

    return out_p[:, :N, :D_out]


if __name__ == "__main__":
    def reference(x, adj, w, b):
        support = jnp.matmul(x, w, precision=jax.lax.Precision.HIGHEST)
        out = jnp.einsum("bij,bjd->bid", adj, support,
                         precision=jax.lax.Precision.HIGHEST)
        return out + b

    key = jax.random.PRNGKey(0)

    # Two small configs: the first hits the A @ (X @ W) path (D_out <= D_in
    # after lane padding), the second hits the (A @ X) @ W path. N=200 is
    # deliberately not a tile multiple to exercise the padding path.
    configs = [
        (2, 200, 48, 96),
        (2, 200, 64, 192),
    ]

    for cfg_idx, (B, N, D_in, D_out) in enumerate(configs):
        key, kx, ka, kw, kb = jax.random.split(key, 5)
        x = jax.random.normal(kx, (B, N, D_in), dtype=jnp.float32)
        adj = jax.random.uniform(ka, (B, N, N), dtype=jnp.float32)
        bound = jnp.sqrt(6.0 / D_in)   # kaiming-uniform-style init (weight shape)
        w = jax.random.uniform(kw, (D_in, D_out), minval=-bound, maxval=bound,
                               dtype=jnp.float32)
        # Module inits bias to zeros; use a small nonzero bias here to actually
        # exercise the bias-add epilogue.
        b = 0.1 * jax.random.normal(kb, (D_out,), dtype=jnp.float32)

        ref = reference(x, adj, w, b)

        # f32 path (faithful to the PyTorch module numerics).
        out = jax.block_until_ready(graph_convolution(x, adj, w, b))
        assert out.shape == (B, N, D_out)
        assert jnp.allclose(out, ref, atol=2e-3, rtol=1e-3), (
            f"f32 mismatch in config {cfg_idx}")

        # bf16 matmul operands, f32 accumulation (v6e/v7x fast path).
        out_bf = jax.block_until_ready(
            graph_convolution(x, adj, w, b, compute_dtype=jnp.bfloat16))
        assert out_bf.shape == (B, N, D_out)
        assert jnp.allclose(out_bf, ref, atol=0.5, rtol=0.05), (
            f"bf16 mismatch in config {cfg_idx}")

    print("KERNEL_OK")
</pallas_src>

<mosaic_0001>
module attributes {stable_mosaic.version = 11 : i64} {
  func.func @_gcn_xw_kernel(%arg0: i32, %arg1: i32, %arg2: i32, %arg3: memref<1x128x128xf32, #tpu.memory_space<vmem>>, %arg4: memref<1x128x128xf32, #tpu.memory_space<vmem>>, %arg5: memref<128x128xf32, #tpu.memory_space<vmem>>, %arg6: memref<1x128xf32, #tpu.memory_space<vmem>>, %arg7: memref<1x128x128xf32, #tpu.memory_space<vmem>>, %arg8: memref<128x128xf32, #tpu.memory_space<vmem>>, %arg9: memref<256x128xf32, #tpu.memory_space<vmem>>) attributes {dimension_semantics = [#tpu.dimension_semantics<parallel>, #tpu.dimension_semantics<arbitrary>, #tpu.dimension_semantics<arbitrary>], iteration_bounds = array<i64: 2, 2, 2>, scalar_prefetch = 0 : i64, scratch_operands = 2 : i64, tpu.core_type = #tpu.core_type<tc>, window_params = [{transform_indices = @transform_0, window_bounds = array<i64: 1, 128, 128>}, {transform_indices = @transform_1, window_bounds = array<i64: 1, 128, 128>}, {pipeline_mode = #tpu.pipeline_mode<synchronous>, transform_indices = @transform_2, window_bounds = array<i64: 128, 128>}, {pipeline_mode = #tpu.pipeline_mode<synchronous>, transform_indices = @transform_3, window_bounds = array<i64: 1, 128>}, {transform_indices = @transform_4, window_bounds = array<i64: 1, 128, 128>}]} {
    %c0_i32 = arith.constant 0 : i32
    %0 = arith.cmpi eq, %arg2, %c0_i32 : i32
    %1 = arith.extui %0 : i1 to i32
    %c0_i32_0 = arith.constant 0 : i32
    %2 = arith.cmpi ne, %1, %c0_i32_0 : i32
    scf.if %2 {
      %cst_11 = arith.constant 0.000000e+00 : f32
      %19 = vector.broadcast %cst_11 : f32 to vector<128x128xf32>
      %c0_12 = arith.constant 0 : index
      %c0_13 = arith.constant 0 : index
      %20 = vector.load %arg8[%c0_12, %c0_13] : memref<128x128xf32, #tpu.memory_space<vmem>>, vector<128x128xf32>
      tpu.vector_store %arg8[%c0_12, %c0_13], %19 {strides = array<i32>} : memref<128x128xf32, #tpu.memory_space<vmem>>, vector<128x128xf32>,
    } else {
    }
    %c128_i32 = arith.constant 128 : i32
    %3 = arith.muli %arg2, %c128_i32 : i32
    %4 = tpu.assume_multiple %3, 128 : i32
    %c0_i32_1 = arith.constant 0 : i32
    %5 = arith.cmpi eq, %arg1, %c0_i32_1 : i32
    %6 = arith.extui %5 : i1 to i32
    %c0_i32_2 = arith.constant 0 : i32
    %7 = arith.cmpi ne, %6, %c0_i32_2 : i32
    scf.if %7 {
      %c0_11 = arith.constant 0 : index
      %c0_12 = arith.constant 0 : index
      %c0_13 = arith.constant 0 : index
      %19 = vector.load %arg3[%c0_11, %c0_12, %c0_13] : memref<1x128x128xf32, #tpu.memory_space<vmem>>, vector<1x128x128xf32>
      %20 = vector.shape_cast %19 : vector<1x128x128xf32> to vector<128x128xf32>
      %c0_14 = arith.constant 0 : index
      %c0_15 = arith.constant 0 : index
      %21 = vector.load %arg5[%c0_14, %c0_15] : memref<128x128xf32, #tpu.memory_space<vmem>>, vector<128x128xf32>
      %cst_16 = arith.constant dense<0.000000e+00> : vector<128x128xf32>
      %22 = tpu.matmul %20, %21, %cst_16 {dimension_numbers = #tpu.dot_dimension_numbers<[1], [0], [0], [1], [0, 0, 1, 1], [], []>} : vector<128x128xf32>, vector<128x128xf32>, vector<128x128xf32> -> vector<128x128xf32>
      %23 = arith.index_cast %4 : i32 to index
      %c0_17 = arith.constant 0 : index
      %24 = vector.load %arg9[%23, %c0_17] : memref<256x128xf32, #tpu.memory_space<vmem>>, vector<128x128xf32>
      tpu.vector_store %arg9[%23, %c0_17], %22 {strides = array<i32>} : memref<256x128xf32, #tpu.memory_space<vmem>>, vector<128x128xf32>,
    } else {
    }
    %c0 = arith.constant 0 : index
    %c0_3 = arith.constant 0 : index
    %c0_4 = arith.constant 0 : index
    %8 = vector.load %arg4[%c0, %c0_3, %c0_4] : memref<1x128x128xf32, #tpu.memory_space<vmem>>, vector<1x128x128xf32>
    %9 = vector.shape_cast %8 : vector<1x128x128xf32> to vector<128x128xf32>
    %c0_5 = arith.constant 0 : index
    %c0_6 = arith.constant 0 : index
    %10 = vector.load %arg8[%c0_5, %c0_6] : memref<128x128xf32, #tpu.memory_space<vmem>>, vector<128x128xf32>
    %11 = arith.index_cast %4 : i32 to index
    %c0_7 = arith.constant 0 : index
    %12 = vector.load %arg9[%11, %c0_7] : memref<256x128xf32, #tpu.memory_space<vmem>>, vector<128x128xf32>
    %cst = arith.constant dense<0.000000e+00> : vector<128x128xf32>
    %13 = tpu.matmul %9, %12, %cst {dimension_numbers = #tpu.dot_dimension_numbers<[1], [0], [0], [1], [0, 0, 1, 1], [], []>} : vector<128x128xf32>, vector<128x128xf32>, vector<128x128xf32> -> vector<128x128xf32>
    %14 = arith.addf %10, %13 : vector<128x128xf32>
    %c0_8 = arith.constant 0 : index
    %c0_9 = arith.constant 0 : index
    %15 = vector.load %arg8[%c0_8, %c0_9] : memref<128x128xf32, #tpu.memory_space<vmem>>, vector<128x128xf32>
    tpu.vector_store %arg8[%c0_8, %c0_9], %14 {strides = array<i32>} : memref<128x128xf32, #tpu.memory_space<vmem>>, vector<128x128xf32>,
    %c1_i32 = arith.constant 1 : i32
    %16 = arith.cmpi eq, %arg2, %c1_i32 : i32
    %17 = arith.extui %16 : i1 to i32
    %c0_i32_10 = arith.constant 0 : i32
    %18 = arith.cmpi ne, %17, %c0_i32_10 : i32
    scf.if %18 {
      %c0_11 = arith.constant 0 : index
      %c0_12 = arith.constant 0 : index
      %19 = vector.load %arg8[%c0_11, %c0_12] : memref<128x128xf32, #tpu.memory_space<vmem>>, vector<128x128xf32>
      %c0_13 = arith.constant 0 : index
      %c0_14 = arith.constant 0 : index
      %20 = vector.load %arg6[%c0_13, %c0_14] : memref<1x128xf32, #tpu.memory_space<vmem>>, vector<1x128xf32>
      %21 = vector.broadcast %20 : vector<1x128xf32> to vector<128x128xf32>
      %22 = arith.addf %19, %21 : vector<128x128xf32>
      %c0_15 = arith.constant 0 : index
      %c0_16 = arith.constant 0 : index
      %c0_17 = arith.constant 0 : index
      %23 = vector.load %arg7[%c0_15, %c0_16, %c0_17] : memref<1x128x128xf32, #tpu.memory_space<vmem>>, vector<1x128x128xf32>
      %24 = vector.shape_cast %23 : vector<1x128x128xf32> to vector<128x128xf32>
      %25 = vector.shape_cast %22 : vector<128x128xf32> to vector<1x128x128xf32>
      tpu.vector_store %arg7[%c0_15, %c0_16, %c0_17], %25 {strides = array<i32>} : memref<1x128x128xf32, #tpu.memory_space<vmem>>, vector<1x128x128xf32>,
    } else {
    }
    return
  }
  func.func @transform_0(%arg0: i32, %arg1: i32, %arg2: i32) -> (i32, i32, i32) {
    %c0_i32 = arith.constant 0 : i32
    %0 = arith.cmpi eq, %arg1, %c0_i32 : i32
    %c0_i32_0 = arith.constant 0 : i32
    %1 = arith.select %0, %arg2, %c0_i32_0 : i32
    %c0_i32_1 = arith.constant 0 : i32
    %c0_i32_2 = arith.constant 0 : i32
    return %arg0, %1, %c0_i32_1 : i32, i32, i32
  }
  func.func @transform_1(%arg0: i32, %arg1: i32, %arg2: i32) -> (i32, i32, i32) {
    %c0_i32 = arith.constant 0 : i32
    return %arg0, %arg1, %arg2 : i32, i32, i32
  }
  func.func @transform_2(%arg0: i32, %arg1: i32, %arg2: i32) -> (i32, i32) {
    %c0_i32 = arith.constant 0 : i32
    %c0_i32_0 = arith.constant 0 : i32
    %c0_i32_1 = arith.constant 0 : i32
    return %c0_i32, %c0_i32_0 : i32, i32
  }
  func.func @transform_3(%arg0: i32, %arg1: i32, %arg2: i32) -> (i32, i32) {
    %c0_i32 = arith.constant 0 : i32
    %c0_i32_0 = arith.constant 0 : i32
    %c0_i32_1 = arith.constant 0 : i32
    return %c0_i32, %c0_i32_0 : i32, i32
  }
  func.func @transform_4(%arg0: i32, %arg1: i32, %arg2: i32) -> (i32, i32, i32) {
    %c0_i32 = arith.constant 0 : i32
    %c0_i32_0 = arith.constant 0 : i32
    return %arg0, %arg1, %c0_i32 : i32, i32, i32
  }
}

</mosaic_0001>

<llo_original>
// kernel: tpu_custom_call.1
$region0: #{tpu_custom_call.1}
  #allocation0 [shape = 'u32[]', space=smem, size = 0x4, offset = 0x4, fixed_abs, tag = 'smem constant byte address 0x4 - core index']
  #allocation1 [shape = 'u32[72,128]{1,0:T(1,128)}', space=vmem, size = 0x9000, scoped, tag = 'internal scratch']
  #allocation2 [shape = 'f32[128,128]{1,0:T(8,128)}', space=vmem, size = 0x10000, scoped, tag = 'scratch operand']
  #allocation3 [shape = 'f32[256,128]{1,0:T(8,128)}', space=vmem, size = 0x20000, scoped, tag = 'scratch operand']
  %s0 = inlined_call_operand.hbm [shape: f32[2,256,128], index: 0, kind: input, shape index: {}]
  %s1 = inlined_call_operand.hbm [shape: f32[2,256,256], index: 1, kind: input, shape index: {}]
  %s2 = inlined_call_operand.hbm [shape: f32[128,128], index: 2, kind: input, shape index: {}]
  %s3 = inlined_call_operand.vmem [shape: f32[1,128], index: 3, kind: input, shape index: {}]
  %s4 = inlined_call_operand.hbm [shape: f32[2,256,128], index: 4, kind: output, shape index: {}]
  %s5 = sld [smem:[#allocation0]]
  $region73: #{tpu_custom_call.1} parent=0
    _
  %s7 = ssub.s32 1, %s5
  %s8 = scalar_select 0, %s7, %s5
  $region1: #{tpu_custom_call.1} parent=0
    #allocation4 [shape = 'u8[131072]{0}', space=vmem, size = 0x20000, scoped, tag = 'input window, operand 0']
    #allocation5 [shape = 's32[2]{0}', space=sflag, size = 0x8, scoped, tag = 'scoped memory for tpu_custom_call.1']
    #allocation6 [shape = 's32[2]{0}', space=sflag, size = 0x8, scoped, tag = 'scoped memory for tpu_custom_call.1']
    #allocation7 [shape = 'u8[131072]{0}', space=vmem, size = 0x20000, scoped, tag = 'input window, operand 1']
    #allocation8 [shape = 's32[2]{0}', space=sflag, size = 0x8, scoped, tag = 'scoped memory for tpu_custom_call.1']
    #allocation9 [shape = 'u8[65536]{0}', space=vmem, size = 0x10000, scoped, tag = 'input window, operand 2, single buffered']
    #allocation10 [shape = 'u8[131072]{0}', space=vmem, size = 0x20000, scoped, tag = 'output window, operand 0']
    %9 = vsyncpa [#allocation5], 0
    %s10 = scalar_lea.sflag [#allocation5], 1
    %11 = vsyncpa %s10, 0
    %12 = vsyncpa [#allocation8], 0
    %s13 = scalar_lea.sflag [#allocation8], 1
    %14 = vsyncpa %s13, 0
    %15 = vsyncpa [#allocation6], 0
    %s16 = scalar_lea.sflag [#allocation6], 1
    %17 = vsyncpa %s16, 0
    loop: start=0, step=1, limit=10
    $region2: #{tpu_custom_call.1} parent=1 // loop_pre_header
      _
    $region3: #{tpu_custom_call.1} parent=1 // loop_header
      %s19 = sphi 0, %s23
      %p20 = scmp.ge.s32.totalorder %s19, 10
      %s26 = sphi 0, %s45
      %s27 = sphi 0, %s41
      %s28 = sphi 0, %s37
      %s29 = sphi 0, %s26
      %s30 = sphi 0, %s27
      %s31 = sphi 0, %s28
      %s32 = sphi 0, %s29
      %s33 = sphi 0, %s30
      %s34 = sphi 0, %s31
      %s54 = sphi 0, %s56
      %s57 = sphi 0, %s54
      %s58 = sphi 0, %s57
      %s74 = sphi 0, %s58
      %s84 = sphi 0, %s86
      %s87 = sphi 0, %s84
      %s88 = sphi 0, %s87
      %s104 = sphi 0, %s88
      %s108 = sphi 0, %s108
      %s110 = sphi 0, %s108
      %s111 = sphi 0, %s110
      %s125 = sphi 0, %s111
      %s129 = sphi 0, %s129
      %s131 = sphi 0, %s129
      %s132 = sphi 0, %s131
      %s146 = sphi 0, %s132
      %s154 = sphi 0, %s156
      %s157 = sphi 0, %s154
      %s158 = sphi 0, %s157
      %s174 = sphi 0, %s158
    $region4: #{tpu_custom_call.1} parent=1 // loop_header_branch
      %22 = sbr.rel (%p20) target = $region8
    $region5: #{tpu_custom_call.1} parent=1 // loop_body
      %s24 = ssub.s32 %s19, 1
      %s25 = ssub.s32 %s19, 2
      %s35 = sadd.s32 1, %s28
      %p36 = scmp.ge.s32.totalorder %s35, 2
      %s37 = scalar_select %p36, 0, %s35
      %s38 = sadd.s32 1, %s27
      %s39 = scalar_select %p36, %s38, %s27
      %p40 = scmp.ge.s32.totalorder %s39, 2
      %s41 = scalar_select %p40, 0, %s39
      %s42 = sadd.s32 1, %s26
      %s43 = scalar_select %p40, %s42, %s26
      %p44 = scmp.ge.s32.totalorder %s43, 2
      %s45 = scalar_select %p44, 0, %s43
      %p46 = scmp.eq.s32.totalorder %s27, 0
      %s47 = scalar_select %p46, %s28, 0
      %p48 = scmp.eq.s32.totalorder %s41, 0
      %s49 = scalar_select %p48, %s37, 0
      %s50 = ssub.s32 %s26, %s45
      %s51 = ssub.s32 %s47, %s49
      %s52 = sor.u32 %s50, %s51
      %p53 = scmp.eq.s32.totalorder %s52, 0
      %s55 = sadd.s32 %s54, 1
      %s56 = scalar_select %p53, %s54, %s55
      %p59 = pneg %p53
      %p60 = scmp.eq.s32.totalorder %s19, 7
      %p61 = por %p59, %p60
      %p62 = scmp.ne.s32.totalorder %s54, %s57
      %p63 = scmp.eq.s32.totalorder %s19, 0
      %p64 = por %p62, %p63
      %p65 = scmp.ne.s32.totalorder %s54, %s57
      %p66 = scmp.eq.s32.totalorder %s24, 7
      %p67 = por %p65, %p66
      %p68 = scmp.ne.s32.totalorder %s57, %s58
      %p69 = scmp.eq.s32.totalorder %s24, 0
      %p70 = por %p68, %p69
      %p71 = scmp.ne.s32.totalorder %s57, %s58
      %p72 = scmp.eq.s32.totalorder %s25, 7
      %p73 = por %p71, %p72
      %p75 = scmp.ne.s32.totalorder %s58, %s74
      %p76 = scmp.eq.s32.totalorder %s25, 0
      %p77 = por %p75, %p76
      %s78 = ssub.s32 %s26, %s45
      %s79 = ssub.s32 %s27, %s41
      %s80 = sor.u32 %s78, %s79
      %s81 = ssub.s32 %s28, %s37
      %s82 = sor.u32 %s80, %s81
      %p83 = scmp.eq.s32.totalorder %s82, 0
      %s85 = sadd.s32 %s84, 1
      %s86 = scalar_select %p83, %s84, %s85
      %p89 = pneg %p83
      %p90 = scmp.eq.s32.totalorder %s19, 7
      %p91 = por %p89, %p90
      %p92 = scmp.ne.s32.totalorder %s84, %s87
      %p93 = scmp.eq.s32.totalorder %s19, 0
      %p94 = por %p92, %p93
      %p95 = scmp.ne.s32.totalorder %s84, %s87
      %p96 = scmp.eq.s32.totalorder %s24, 7
      %p97 = por %p95, %p96
      %p98 = scmp.ne.s32.totalorder %s87, %s88
      %p99 = scmp.eq.s32.totalorder %s24, 0
      %p100 = por %p98, %p99
      %p101 = scmp.ne.s32.totalorder %s87, %s88
      %p102 = scmp.eq.s32.totalorder %s25, 7
      %p103 = por %p101, %p102
      %p105 = scmp.ne.s32.totalorder %s88, %s104
      %p106 = scmp.eq.s32.totalorder %s25, 0
      %p107 = por %p105, %p106
      %s109 = sadd.s32 %s108, 1
      %p112 = scmp.eq.s32.totalorder %s19, 7
      %p113 = scmp.ne.s32.totalorder %s108, %s110
      %p114 = scmp.eq.s32.totalorder %s19, 0
      %p115 = por %p113, %p114
      %p116 = scmp.ne.s32.totalorder %s108, %s110
      %p117 = scmp.eq.s32.totalorder %s24, 7
      %p118 = por %p116, %p117
      %p119 = scmp.ne.s32.totalorder %s110, %s111
      %p120 = scmp.eq.s32.totalorder %s24, 0
      %p121 = por %p119, %p120
      %p122 = scmp.ne.s32.totalorder %s110, %s111
      %p123 = scmp.eq.s32.totalorder %s25, 7
      %p124 = por %p122, %p123
      %p126 = scmp.ne.s32.totalorder %s111, %s125
      %p127 = scmp.eq.s32.totalorder %s25, 0
      %p128 = por %p126, %p127
      %s130 = sadd.s32 %s129, 1
      %p133 = scmp.eq.s32.totalorder %s19, 7
      %p134 = scmp.ne.s32.totalorder %s129, %s131
      %p135 = scmp.eq.s32.totalorder %s19, 0
      %p136 = por %p134, %p135
      %p137 = scmp.ne.s32.totalorder %s129, %s131
      %p138 = scmp.eq.s32.totalorder %s24, 7
      %p139 = por %p137, %p138
      %p140 = scmp.ne.s32.totalorder %s131, %s132
      %p141 = scmp.eq.s32.totalorder %s24, 0
      %p142 = por %p140, %p141
      %p143 = scmp.ne.s32.totalorder %s131, %s132
      %p144 = scmp.eq.s32.totalorder %s25, 7
      %p145 = por %p143, %p144
      %p147 = scmp.ne.s32.totalorder %s132, %s146
      %p148 = scmp.eq.s32.totalorder %s25, 0
      %p149 = por %p147, %p148
      %s150 = ssub.s32 %s26, %s45
      %s151 = ssub.s32 %s27, %s41
      %s152 = sor.u32 %s150, %s151
      %p153 = scmp.eq.s32.totalorder %s152, 0
      %s155 = sadd.s32 %s154, 1
      %s156 = scalar_select %p153, %s154, %s155
      %p159 = pneg %p153
      %p160 = scmp.eq.s32.totalorder %s19, 7
      %p161 = por %p159, %p160
      %p162 = scmp.ne.s32.totalorder %s154, %s157
      %p163 = scmp.eq.s32.totalorder %s19, 0
      %p164 = por %p162, %p163
      %p165 = scmp.ne.s32.totalorder %s154, %s157
      %p166 = scmp.eq.s32.totalorder %s24, 7
      %p167 = por %p165, %p166
      %p168 = scmp.ne.s32.totalorder %s157, %s158
      %p169 = scmp.eq.s32.totalorder %s24, 0
      %p170 = por %p168, %p169
      %p171 = scmp.ne.s32.totalorder %s157, %s158
      %p172 = scmp.eq.s32.totalorder %s25, 7
      %p173 = por %p171, %p172
      %p175 = scmp.ne.s32.totalorder %s158, %s174
      %p176 = scmp.eq.s32.totalorder %s25, 0
      %p177 = por %p175, %p176
      %p178 = scmp.le.s32.totalorder 1, %s19
      %p179 = scmp.lt.s32.totalorder %s19, 9
      %p180 = pnand %p178, %p179
      %p181 = pneg %p180
      // Predicated region
      $region9: #{tpu_custom_call.1} parent=5 // pred_check
        _
      $region10: #{tpu_custom_call.1} parent=5 // pred_check_branch
        %183 = sbr.rel (%p180) target = $region12
      $region11: #{tpu_custom_call.1} parent=5 // pred_region
        %s184 = ssub.s32 %s19, 1
        // Predicated region
        $region13: #{tpu_custom_call.1} parent=11 // pred_check
          %p185 = pneg %p121
        $region14: #{tpu_custom_call.1} parent=11 // pred_check_branch
          %187 = sbr.rel (%p185) target = $region16
        $region15: #{tpu_custom_call.1} parent=11 // pred_region
          %189 = vsyncadd [#allocation8], 0
          %s190 = sshll.u32 %s2, 4
          %s191 = int_to_ptr.hbm [resolvable:$true] %s190
          %s192 = sshll.u32 [#allocation9], 4
          %s193 = int_to_ptr.vmem [resolvable:$true] %s192
          %198 = dma.hbm_to_vmem [thread:$0]  %s191, 2048, %s193, [#allocation8], 128, 128, 8
        $region16: #{tpu_custom_call.1} parent=11 // pred_fallthru
          _
        // Predicated region
        $region17: #{tpu_custom_call.1} parent=11 // pred_check
          %p199 = pneg %p142
        $region18: #{tpu_custom_call.1} parent=11 // pred_check_branch
          %201 = sbr.rel (%p199) target = $region20
        $region19: #{tpu_custom_call.1} parent=11 // pred_region
          _
        $region20: #{tpu_custom_call.1} parent=11 // pred_fallthru
          _
      $region12: #{tpu_custom_call.1} parent=5 // pred_fallthru
        _
      %p202 = scmp.lt.s32.totalorder %s19, 8
      // Predicated region
      $region21: #{tpu_custom_call.1} parent=5 // pred_check
        %p203 = pneg %p202
      $region22: #{tpu_custom_call.1} parent=5 // pred_check_branch
        %205 = sbr.rel (%p203) target = $region24
      $region23: #{tpu_custom_call.1} parent=5 // pred_region
        // Predicated region
        $region25: #{tpu_custom_call.1} parent=23 // pred_check
          %p206 = pneg %p64
        $region26: #{tpu_custom_call.1} parent=23 // pred_check_branch
          %208 = sbr.rel (%p206) target = $region28
        $region27: #{tpu_custom_call.1} parent=23 // pred_region
          %s209 = sand.u32 %s54, 1
          %s210 = scalar_lea.sflag [#allocation5], %s209
          %s211 = sand.u32 %s54, 1
          %s212 = smul.addr %s211, 128
          %s213 = scalar_lea.vmem [#allocation4], %s212
          %p214 = scmp.eq.s32.totalorder %s27, 0
          %s215 = scalar_select %p214, %s28, 0
          %s216 = smul.u32 16, %s215
          %218 = vsyncadd %s210, 0
          %s219 = smul.addr %s26, 32
          %s220 = sadd.s32 %s216, %s219
          %s221 = smul.addr %s220, 8
          %s222 = scalar_lea.hbm %s0, %s221
          %s223 = sshll.u32 %s222, 4
          %s224 = int_to_ptr.hbm [resolvable:$true] %s223
          %s225 = sshll.u32 %s213, 4
          %s226 = int_to_ptr.vmem [resolvable:$true] %s225
          %231 = dma.hbm_to_vmem [thread:$0]  %s224, 2048, %s226, %s210, 128, 128, 8
        $region28: #{tpu_custom_call.1} parent=23 // pred_fallthru
          _
        // Predicated region
        $region29: #{tpu_custom_call.1} parent=23 // pred_check
          %p232 = pneg %p94
        $region30: #{tpu_custom_call.1} parent=23 // pred_check_branch
          %234 = sbr.rel (%p232) target = $region32
        $region31: #{tpu_custom_call.1} parent=23 // pred_region
          %s235 = sand.u32 %s19, 1
          %s236 = scalar_lea.sflag [#allocation8], %s235
          %s237 = sand.u32 %s84, 1
          %s238 = smul.addr %s237, 128
          %s239 = scalar_lea.vmem [#allocation7], %s238
          %s240 = smul.u32 16, %s27
          %242 = vsyncadd %s236, 0
          %s243 = smul.addr %s240, 2
          %s244 = sadd.s32 %s28, %s243
          %s245 = smul.addr %s26, 64
          %s246 = sadd.s32 %s244, %s245
          %s247 = smul.addr %s246, 8
          %s248 = scalar_lea.hbm %s1, %s247
          %s249 = sshll.u32 %s248, 4
          %s250 = int_to_ptr.hbm [resolvable:$true] %s249
          %s251 = sshll.u32 %s239, 4
          %s252 = int_to_ptr.vmem [resolvable:$true] %s251
          %257 = dma.hbm_to_vmem [thread:$0]  %s250, 2048, %s252, %s236, 256, 128, 8
        $region32: #{tpu_custom_call.1} parent=23 // pred_fallthru
          _
      $region24: #{tpu_custom_call.1} parent=5 // pred_fallthru
        _
      %p258 = scmp.le.s32.totalorder 1, %s19
      %p259 = scmp.lt.s32.totalorder %s19, 9
      %p260 = pnand %p258, %p259
      %p261 = pneg %p260
      // Predicated region
      $region33: #{tpu_custom_call.1} parent=5 // pred_check
        _
      $region34: #{tpu_custom_call.1} parent=5 // pred_check_branch
        %263 = sbr.rel (%p260) target = $region36
      $region35: #{tpu_custom_call.1} parent=5 // pred_region
        %s264 = ssub.s32 %s19, 1
        %s265 = sand.u32 %s57, 1
        %s266 = scalar_lea.sflag [#allocation5], %s265
        %s267 = sand.u32 %s57, 1
        %s268 = smul.addr %s267, 128
        %s269 = scalar_lea.vmem [#allocation4], %s268
        // Predicated region
        $region37: #{tpu_custom_call.1} parent=35 // pred_check
          %p270 = pneg %p70
        $region38: #{tpu_custom_call.1} parent=35 // pred_check_branch
          %272 = sbr.rel (%p270) target = $region40
        $region39: #{tpu_custom_call.1} parent=35 // pred_region
          %274 = dma.done %s266, 2048
        $region40: #{tpu_custom_call.1} parent=35 // pred_fallthru
          _
        %s275 = sand.u32 %s24, 1
        %s276 = scalar_lea.sflag [#allocation8], %s275
        %s277 = sand.u32 %s87, 1
        %s278 = smul.addr %s277, 128
        %s279 = scalar_lea.vmem [#allocation7], %s278
        // Predicated region
        $region41: #{tpu_custom_call.1} parent=35 // pred_check
          %p280 = pneg %p100
        $region42: #{tpu_custom_call.1} parent=35 // pred_check_branch
          %282 = sbr.rel (%p280) target = $region44
        $region43: #{tpu_custom_call.1} parent=35 // pred_region
          %284 = dma.done %s276, 2048
        $region44: #{tpu_custom_call.1} parent=35 // pred_fallthru
          _
        // Predicated region
        $region45: #{tpu_custom_call.1} parent=35 // pred_check
          %p285 = pneg %p121
        $region46: #{tpu_custom_call.1} parent=35 // pred_check_branch
          %287 = sbr.rel (%p285) target = $region48
        $region47: #{tpu_custom_call.1} parent=35 // pred_region
          %289 = dma.done [#allocation8], 2048
        $region48: #{tpu_custom_call.1} parent=35 // pred_fallthru
          _
        %s290 = sand.u32 %s57, 1
        %s291 = scalar_lea.sflag [#allocation5], %s290
        %s292 = sand.u32 %s57, 1
        %s293 = smul.addr %s292, 128
        %s294 = scalar_lea.vmem [#allocation4], %s293
        %p295 = pneg %p70
        %p296 = pneg %p67
        %s297 = sand.u32 %s24, 1
        %s298 = scalar_lea.sflag [#allocation8], %s297
        %s299 = sand.u32 %s87, 1
        %s300 = smul.addr %s299, 128
        %s301 = scalar_lea.vmem [#allocation7], %s300
        %p302 = pneg %p100
        %p303 = pneg %p97
        %p304 = pneg %p121
        %p305 = pneg %p118
        %p306 = pneg %p142
        %p307 = pneg %p139
        %p308 = pneg %p170
        %p309 = pneg %p167
        %s310 = sand.u32 %s157, 1
        %s311 = scalar_lea.sflag [#allocation6], %s310
        %s312 = sand.u32 %s157, 1
        %s313 = smul.addr %s312, 128
        %s314 = scalar_lea.vmem [#allocation10], %s313
        %p315 = scmp.eq.s32.totalorder %s30, 0
        %s316 = scalar_select %p315, %s31, 0
        %s317 = smul.u32 16, %s316
        %s318 = smul.u32 16, %s30
        %s319 = smul.u32 16, %s30
        %p320 = scmp.eq.s32.totalorder %s31, 0
        // Predicated region
        $region49: #{tpu_custom_call.1} parent=35 // pred_check
          %p321 = pneg %p320
        $region50: #{tpu_custom_call.1} parent=35 // pred_check_branch
          %323 = sbr.rel (%p321) target = $region52
        $region51: #{tpu_custom_call.1} parent=35 // pred_region
          %324 = vst [vmem:[#allocation2] sm:$0xff] 0.0
          %325 = vst [vmem:[#allocation2 + $0x8] sm:$0xff] 0.0
          %326 = vst [vmem:[#allocation2 + $0x10] sm:$0xff] 0.0
          %327 = vst [vmem:[#allocation2 + $0x18] sm:$0xff] 0.0
          %328 = vst [vmem:[#allocation2 + $0x20] sm:$0xff] 0.0
          %329 = vst [vmem:[#allocation2 + $0x28] sm:$0xff] 0.0
          %330 = vst [vmem:[#allocation2 + $0x30] sm:$0xff] 0.0
          %331 = vst [vmem:[#allocation2 + $0x38] sm:$0xff] 0.0
          %332 = vst [vmem:[#allocation2 + $0x40] sm:$0xff] 0.0
          %333 = vst [vmem:[#allocation2 + $0x48] sm:$0xff] 0.0
          %334 = vst [vmem:[#allocation2 + $0x50] sm:$0xff] 0.0
          %335 = vst [vmem:[#allocation2 + $0x58] sm:$0xff] 0.0
          %336 = vst [vmem:[#allocation2 + $0x60] sm:$0xff] 0.0
          %337 = vst [vmem:[#allocation2 + $0x68] sm:$0xff] 0.0
          %338 = vst [vmem:[#allocation2 + $0x70] sm:$0xff] 0.0
          %339 = vst [vmem:[#allocation2 + $0x78] sm:$0xff] 0.0
        $region52: #{tpu_custom_call.1} parent=35 // pred_fallthru
          _
        %s340 = smul.u32 %s31, 128
        %p341 = scmp.eq.s32.totalorder %s30, 0
        // Predicated region
        $region53: #{tpu_custom_call.1} parent=35 // pred_check
          %p342 = pneg %p341
        $region54: #{tpu_custom_call.1} parent=35 // pred_check_branch
          %344 = sbr.rel (%p342) target = $region56
        $region55: #{tpu_custom_call.1} parent=35 // pred_region
          %v345 = vld [vmem:[%s269] sm:$0xff]
          %v346 = vld [vmem:[%s269 + $0x8] sm:$0xff]
          %v347 = vld [vmem:[%s269 + $0x10] sm:$0xff]
          %v348 = vld [vmem:[%s269 + $0x18] sm:$0xff]
          %v349 = vld [vmem:[%s269 + $0x20] sm:$0xff]
          %v350 = vld [vmem:[%s269 + $0x28] sm:$0xff]
          %v351 = vld [vmem:[%s269 + $0x30] sm:$0xff]
          %v352 = vld [vmem:[%s269 + $0x38] sm:$0xff]
          %v353 = vld [vmem:[%s269 + $0x40] sm:$0xff]
          %v354 = vld [vmem:[%s269 + $0x48] sm:$0xff]
          %v355 = vld [vmem:[%s269 + $0x50] sm:$0xff]
          %v356 = vld [vmem:[%s269 + $0x58] sm:$0xff]
          %v357 = vld [vmem:[%s269 + $0x60] sm:$0xff]
          %v358 = vld [vmem:[%s269 + $0x68] sm:$0xff]
          %v359 = vld [vmem:[%s269 + $0x70] sm:$0xff]
          %v360 = vld [vmem:[%s269 + $0x78] sm:$0xff]
          %v361 = vld [vmem:[#allocation9] sm:$0xff]
          %v362 = vld [vmem:[#allocation9 + $0x8] sm:$0xff]
          %v363 = vld [vmem:[#allocation9 + $0x10] sm:$0xff]
          %v364 = vld [vmem:[#allocation9 + $0x18] sm:$0xff]
          %v365 = vld [vmem:[#allocation9 + $0x20] sm:$0xff]
          %v366 = vld [vmem:[#allocation9 + $0x28] sm:$0xff]
          %v367 = vld [vmem:[#allocation9 + $0x30] sm:$0xff]
          %v368 = vld [vmem:[#allocation9 + $0x38] sm:$0xff]
          %v369 = vld [vmem:[#allocation9 + $0x40] sm:$0xff]
          %v370 = vld [vmem:[#allocation9 + $0x48] sm:$0xff]
          %v371 = vld [vmem:[#allocation9 + $0x50] sm:$0xff]
          %v372 = vld [vmem:[#allocation9 + $0x58] sm:$0xff]
          %v373 = vld [vmem:[#allocation9 + $0x60] sm:$0xff]
          %v374 = vld [vmem:[#allocation9 + $0x68] sm:$0xff]
          %v375 = vld [vmem:[#allocation9 + $0x70] sm:$0xff]
          %v376 = vld [vmem:[#allocation9 + $0x78] sm:$0xff]
          %377 = vmatpush.msra.mxu0 %v376
          %378 = vmatpush.msra.mxu0 %v375
          %379 = vmatpush.msra.mxu0 %v374
          %380 = vmatpush.msra.mxu0 %v373
          %381 = vmatpush.msra.mxu0 %v372
          %382 = vmatpush.msra.mxu0 %v371
          %383 = vmatpush.msra.mxu0 %v370
          %384 = vmatpush.msra.mxu0 %v369
          %385 = vmatpush.msra.mxu0 %v368
          %386 = vmatpush.msra.mxu0 %v367
          %387 = vmatpush.msra.mxu0 %v366
          %388 = vmatpush.msra.mxu0 %v365
          %389 = vmatpush.msra.mxu0 %v364
          %390 = vmatpush.msra.mxu0 %v363
          %391 = vmatpush.msra.mxu0 %v362
          %392 = vmatpush.msra.mxu0 %v361
          %393 = vmatmul.f32.gmra.mxu0 %v345
          %v394 = vpop.f32.mrf.mxu0
          %v395 = vadd.f32 0.0, %v394
          %396 = vmatmul.f32.gmra.mxu0 %v346
          %v397 = vpop.f32.mrf.mxu0
          %v398 = vadd.f32 0.0, %v397
          %399 = vmatmul.f32.gmra.mxu0 %v347
          %v400 = vpop.f32.mrf.mxu0
          %v401 = vadd.f32 0.0, %v400
          %402 = vmatmul.f32.gmra.mxu0 %v348
          %v403 = vpop.f32.mrf.mxu0
          %v404 = vadd.f32 0.0, %v403
          %405 = vmatmul.f32.gmra.mxu0 %v349
          %v406 = vpop.f32.mrf.mxu0
          %v407 = vadd.f32 0.0, %v406
          %408 = vmatmul.f32.gmra.mxu0 %v350
          %v409 = vpop.f32.mrf.mxu0
          %v410 = vadd.f32 0.0, %v409
          %411 = vmatmul.f32.gmra.mxu0 %v351
          %v412 = vpop.f32.mrf.mxu0
          %v413 = vadd.f32 0.0, %v412
          %414 = vmatmul.f32.gmra.mxu0 %v352
          %v415 = vpop.f32.mrf.mxu0
          %v416 = vadd.f32 0.0, %v415
          %417 = vmatmul.f32.gmra.mxu0 %v353
          %v418 = vpop.f32.mrf.mxu0
          %v419 = vadd.f32 0.0, %v418
          %420 = vmatmul.f32.gmra.mxu0 %v354
          %v421 = vpop.f32.mrf.mxu0
          %v422 = vadd.f32 0.0, %v421
          %423 = vmatmul.f32.gmra.mxu0 %v355
          %v424 = vpop.f32.mrf.mxu0
          %v425 = vadd.f32 0.0, %v424
          %426 = vmatmul.f32.gmra.mxu0 %v356
          %v427 = vpop.f32.mrf.mxu0
          %v428 = vadd.f32 0.0, %v427
          %429 = vmatmul.f32.gmra.mxu0 %v357
          %v430 = vpop.f32.mrf.mxu0
          %v431 = vadd.f32 0.0, %v430
          %432 = vmatmul.f32.gmra.mxu0 %v358
          %v433 = vpop.f32.mrf.mxu0
          %v434 = vadd.f32 0.0, %v433
          %435 = vmatmul.f32.gmra.mxu0 %v359
          %v436 = vpop.f32.mrf.mxu0
          %v437 = vadd.f32 0.0, %v436
          %438 = vmatmul.f32.gmra.mxu0 %v360
          %v439 = vpop.f32.mrf.mxu0
          %v440 = vadd.f32 0.0, %v439
          %441 = vdwg.mxu0
          %s442 = scalar_lea.vmem [#allocation3], %s340
          %443 = vst [vmem:[%s442] sm:$0xff] %v395
          %444 = vst [vmem:[%s442 + $0x8] sm:$0xff] %v398
          %445 = vst [vmem:[%s442 + $0x10] sm:$0xff] %v401
          %446 = vst [vmem:[%s442 + $0x18] sm:$0xff] %v404
          %447 = vst [vmem:[%s442 + $0x20] sm:$0xff] %v407
          %448 = vst [vmem:[%s442 + $0x28] sm:$0xff] %v410
          %449 = vst [vmem:[%s442 + $0x30] sm:$0xff] %v413
          %450 = vst [vmem:[%s442 + $0x38] sm:$0xff] %v416
          %451 = vst [vmem:[%s442 + $0x40] sm:$0xff] %v419
          %452 = vst [vmem:[%s442 + $0x48] sm:$0xff] %v422
          %453 = vst [vmem:[%s442 + $0x50] sm:$0xff] %v425
          %454 = vst [vmem:[%s442 + $0x58] sm:$0xff] %v428
          %455 = vst [vmem:[%s442 + $0x60] sm:$0xff] %v431
          %456 = vst [vmem:[%s442 + $0x68] sm:$0xff] %v434
          %457 = vst [vmem:[%s442 + $0x70] sm:$0xff] %v437
          %458 = vst [vmem:[%s442 + $0x78] sm:$0xff] %v440
        $region56: #{tpu_custom_call.1} parent=35 // pred_fallthru
          _
        %v459 = vld [vmem:[%s279] sm:$0xff]
        %v460 = vld [vmem:[%s279 + $0x8] sm:$0xff]
        %v461 = vld [vmem:[%s279 + $0x10] sm:$0xff]
        %v462 = vld [vmem:[%s279 + $0x18] sm:$0xff]
        %v463 = vld [vmem:[%s279 + $0x20] sm:$0xff]
        %v464 = vld [vmem:[%s279 + $0x28] sm:$0xff]
        %v465 = vld [vmem:[%s279 + $0x30] sm:$0xff]
        %v466 = vld [vmem:[%s279 + $0x38] sm:$0xff]
        %v467 = vld [vmem:[%s279 + $0x40] sm:$0xff]
        %v468 = vld [vmem:[%s279 + $0x48] sm:$0xff]
        %v469 = vld [vmem:[%s279 + $0x50] sm:$0xff]
        %v470 = vld [vmem:[%s279 + $0x58] sm:$0xff]
        %v471 = vld [vmem:[%s279 + $0x60] sm:$0xff]
        %v472 = vld [vmem:[%s279 + $0x68] sm:$0xff]
        %v473 = vld [vmem:[%s279 + $0x70] sm:$0xff]
        %v474 = vld [vmem:[%s279 + $0x78] sm:$0xff]
        %v475 = vld [vmem:[#allocation2] sm:$0xff]
        %v476 = vld [vmem:[#allocation2 + $0x8] sm:$0xff]
        %v477 = vld [vmem:[#allocation2 + $0x10] sm:$0xff]
        %v478 = vld [vmem:[#allocation2 + $0x18] sm:$0xff]
        %v479 = vld [vmem:[#allocation2 + $0x20] sm:$0xff]
        %v480 = vld [vmem:[#allocation2 + $0x28] sm:$0xff]
        %v481 = vld [vmem:[#allocation2 + $0x30] sm:$0xff]
        %v482 = vld [vmem:[#allocation2 + $0x38] sm:$0xff]
        %v483 = vld [vmem:[#allocation2 + $0x40] sm:$0xff]
        %v484 = vld [vmem:[#allocation2 + $0x48] sm:$0xff]
        %v485 = vld [vmem:[#allocation2 + $0x50] sm:$0xff]
        %v486 = vld [vmem:[#allocation2 + $0x58] sm:$0xff]
        %v487 = vld [vmem:[#allocation2 + $0x60] sm:$0xff]
        %v488 = vld [vmem:[#allocation2 + $0x68] sm:$0xff]
        %v489 = vld [vmem:[#allocation2 + $0x70] sm:$0xff]
        %v490 = vld [vmem:[#allocation2 + $0x78] sm:$0xff]
        %s491 = scalar_lea.vmem [#allocation3], %s340
        %v492 = vld [vmem:[%s491] sm:$0xff]
        %v493 = vld [vmem:[%s491 + $0x8] sm:$0xff]
        %v494 = vld [vmem:[%s491 + $0x10] sm:$0xff]
        %v495 = vld [vmem:[%s491 + $0x18] sm:$0xff]
        %v496 = vld [vmem:[%s491 + $0x20] sm:$0xff]
        %v497 = vld [vmem:[%s491 + $0x28] sm:$0xff]
        %v498 = vld [vmem:[%s491 + $0x30] sm:$0xff]
        %v499 = vld [vmem:[%s491 + $0x38] sm:$0xff]
        %v500 = vld [vmem:[%s491 + $0x40] sm:$0xff]
        %v501 = vld [vmem:[%s491 + $0x48] sm:$0xff]
        %v502 = vld [vmem:[%s491 + $0x50] sm:$0xff]
        %v503 = vld [vmem:[%s491 + $0x58] sm:$0xff]
        %v504 = vld [vmem:[%s491 + $0x60] sm:$0xff]
        %v505 = vld [vmem:[%s491 + $0x68] sm:$0xff]
        %v506 = vld [vmem:[%s491 + $0x70] sm:$0xff]
        %v507 = vld [vmem:[%s491 + $0x78] sm:$0xff]
        %508 = vmatpush.msra.mxu0 %v507
        %509 = vmatpush.msra.mxu0 %v506
        %510 = vmatpush.msra.mxu0 %v505
        %511 = vmatpush.msra.mxu0 %v504
        %512 = vmatpush.msra.mxu0 %v503
        %513 = vmatpush.msra.mxu0 %v502
        %514 = vmatpush.msra.mxu0 %v501
        %515 = vmatpush.msra.mxu0 %v500
        %516 = vmatpush.msra.mxu0 %v499
        %517 = vmatpush.msra.mxu0 %v498
        %518 = vmatpush.msra.mxu0 %v497
        %519 = vmatpush.msra.mxu0 %v496
        %520 = vmatpush.msra.mxu0 %v495
        %521 = vmatpush.msra.mxu0 %v494
        %522 = vmatpush.msra.mxu0 %v493
        %523 = vmatpush.msra.mxu0 %v492
        %524 = vmatmul.f32.gmra.mxu0 %v459
        %v525 = vpop.f32.mrf.mxu0
        %v526 = vadd.f32 0.0, %v525
        %527 = vmatmul.f32.gmra.mxu0 %v460
        %v528 = vpop.f32.mrf.mxu0
        %v529 = vadd.f32 0.0, %v528
        %530 = vmatmul.f32.gmra.mxu0 %v461
        %v531 = vpop.f32.mrf.mxu0
        %v532 = vadd.f32 0.0, %v531
        %533 = vmatmul.f32.gmra.mxu0 %v462
        %v534 = vpop.f32.mrf.mxu0
        %v535 = vadd.f32 0.0, %v534
        %536 = vmatmul.f32.gmra.mxu0 %v463
        %v537 = vpop.f32.mrf.mxu0
        %v538 = vadd.f32 0.0, %v537
        %539 = vmatmul.f32.gmra.mxu0 %v464
        %v540 = vpop.f32.mrf.mxu0
        %v541 = vadd.f32 0.0, %v540
        %542 = vmatmul.f32.gmra.mxu0 %v465
        %v543 = vpop.f32.mrf.mxu0
        %v544 = vadd.f32 0.0, %v543
        %545 = vmatmul.f32.gmra.mxu0 %v466
        %v546 = vpop.f32.mrf.mxu0
        %v547 = vadd.f32 0.0, %v546
        %548 = vmatmul.f32.gmra.mxu0 %v467
        %v549 = vpop.f32.mrf.mxu0
        %v550 = vadd.f32 0.0, %v549
        %551 = vmatmul.f32.gmra.mxu0 %v468
        %v552 = vpop.f32.mrf.mxu0
        %v553 = vadd.f32 0.0, %v552
        %554 = vmatmul.f32.gmra.mxu0 %v469
        %v555 = vpop.f32.mrf.mxu0
        %v556 = vadd.f32 0.0, %v555
        %557 = vmatmul.f32.gmra.mxu0 %v470
        %v558 = vpop.f32.mrf.mxu0
        %v559 = vadd.f32 0.0, %v558
        %560 = vmatmul.f32.gmra.mxu0 %v471
        %v561 = vpop.f32.mrf.mxu0
        %v562 = vadd.f32 0.0, %v561
        %563 = vmatmul.f32.gmra.mxu0 %v472
        %v564 = vpop.f32.mrf.mxu0
        %v565 = vadd.f32 0.0, %v564
        %566 = vmatmul.f32.gmra.mxu0 %v473
        %v567 = vpop.f32.mrf.mxu0
        %v568 = vadd.f32 0.0, %v567
        %569 = vmatmul.f32.gmra.mxu0 %v474
        %v570 = vpop.f32.mrf.mxu0
        %v571 = vadd.f32 0.0, %v570
        %572 = vdwg.mxu0
        %v573 = vadd.f32 %v475, %v526
        %v574 = vadd.f32 %v476, %v529
        %v575 = vadd.f32 %v477, %v532
        %v576 = vadd.f32 %v478, %v535
        %v577 = vadd.f32 %v479, %v538
        %v578 = vadd.f32 %v480, %v541
        %v579 = vadd.f32 %v481, %v544
        %v580 = vadd.f32 %v482, %v547
        %v581 = vadd.f32 %v483, %v550
        %v582 = vadd.f32 %v484, %v553
        %v583 = vadd.f32 %v485, %v556
        %v584 = vadd.f32 %v486, %v559
        %v585 = vadd.f32 %v487, %v562
        %v586 = vadd.f32 %v488, %v565
        %v587 = vadd.f32 %v489, %v568
        %v588 = vadd.f32 %v490, %v571
        %589 = vst [vmem:[#allocation2] sm:$0xff] %v573
        %590 = vst [vmem:[#allocation2 + $0x8] sm:$0xff] %v574
        %591 = vst [vmem:[#allocation2 + $0x10] sm:$0xff] %v575
        %592 = vst [vmem:[#allocation2 + $0x18] sm:$0xff] %v576
        %593 = vst [vmem:[#allocation2 + $0x20] sm:$0xff] %v577
        %594 = vst [vmem:[#allocation2 + $0x28] sm:$0xff] %v578
        %595 = vst [vmem:[#allocation2 + $0x30] sm:$0xff] %v579
        %596 = vst [vmem:[#allocation2 + $0x38] sm:$0xff] %v580
        %597 = vst [vmem:[#allocation2 + $0x40] sm:$0xff] %v581
        %598 = vst [vmem:[#allocation2 + $0x48] sm:$0xff] %v582
        %599 = vst [vmem:[#allocation2 + $0x50] sm:$0xff] %v583
        %600 = vst [vmem:[#allocation2 + $0x58] sm:$0xff] %v584
        %601 = vst [vmem:[#allocation2 + $0x60] sm:$0xff] %v585
        %602 = vst [vmem:[#allocation2 + $0x68] sm:$0xff] %v586
        %603 = vst [vmem:[#allocation2 + $0x70] sm:$0xff] %v587
        %604 = vst [vmem:[#allocation2 + $0x78] sm:$0xff] %v588
        %p605 = scmp.eq.s32.totalorder %s31, 1
        // Predicated region
        $region57: #{tpu_custom_call.1} parent=35 // pred_check
          %p606 = pneg %p605
        $region58: #{tpu_custom_call.1} parent=35 // pred_check_branch
          %608 = sbr.rel (%p606) target = $region60
        $region59: #{tpu_custom_call.1} parent=35 // pred_region
          %v609 = vld [vmem:[#allocation2] sm:$0xff]
          %v610 = vld [vmem:[#allocation2 + $0x8] sm:$0xff]
          %v611 = vld [vmem:[#allocation2 + $0x10] sm:$0xff]
          %v612 = vld [vmem:[#allocation2 + $0x18] sm:$0xff]
          %v613 = vld [vmem:[#allocation2 + $0x20] sm:$0xff]
          %v614 = vld [vmem:[#allocation2 + $0x28] sm:$0xff]
          %v615 = vld [vmem:[#allocation2 + $0x30] sm:$0xff]
          %v616 = vld [vmem:[#allocation2 + $0x38] sm:$0xff]
          %v617 = vld [vmem:[#allocation2 + $0x40] sm:$0xff]
          %v618 = vld [vmem:[#allocation2 + $0x48] sm:$0xff]
          %v619 = vld [vmem:[#allocation2 + $0x50] sm:$0xff]
          %v620 = vld [vmem:[#allocation2 + $0x58] sm:$0xff]
          %v621 = vld [vmem:[#allocation2 + $0x60] sm:$0xff]
          %v622 = vld [vmem:[#allocation2 + $0x68] sm:$0xff]
          %v623 = vld [vmem:[#allocation2 + $0x70] sm:$0xff]
          %v624 = vld [vmem:[#allocation2 + $0x78] sm:$0xff]
          %v625 = vld [vmem:[%s3] sm:$0x1]
          %v627 = vperm.slane %v625, 0
          %v629 = vadd.f32 %v609, %v627
          %v630 = vadd.f32 %v610, %v627
          %v631 = vadd.f32 %v611, %v627
          %v632 = vadd.f32 %v612, %v627
          %v633 = vadd.f32 %v613, %v627
          %v634 = vadd.f32 %v614, %v627
          %v635 = vadd.f32 %v615, %v627
          %v636 = vadd.f32 %v616, %v627
          %v637 = vadd.f32 %v617, %v627
          %v638 = vadd.f32 %v618, %v627
          %v639 = vadd.f32 %v619, %v627
          %v640 = vadd.f32 %v620, %v627
          %v641 = vadd.f32 %v621, %v627
          %v642 = vadd.f32 %v622, %v627
          %v643 = vadd.f32 %v623, %v627
          %v644 = vadd.f32 %v624, %v627
          %645 = vst [vmem:[%s314] sm:$0xff] %v629
          %646 = vst [vmem:[%s314 + $0x8] sm:$0xff] %v630
          %647 = vst [vmem:[%s314 + $0x10] sm:$0xff] %v631
          %648 = vst [vmem:[%s314 + $0x18] sm:$0xff] %v632
          %649 = vst [vmem:[%s314 + $0x20] sm:$0xff] %v633
          %650 = vst [vmem:[%s314 + $0x28] sm:$0xff] %v634
          %651 = vst [vmem:[%s314 + $0x30] sm:$0xff] %v635
          %652 = vst [vmem:[%s314 + $0x38] sm:$0xff] %v636
          %653 = vst [vmem:[%s314 + $0x40] sm:$0xff] %v637
          %654 = vst [vmem:[%s314 + $0x48] sm:$0xff] %v638
          %655 = vst [vmem:[%s314 + $0x50] sm:$0xff] %v639
          %656 = vst [vmem:[%s314 + $0x58] sm:$0xff] %v640
          %657 = vst [vmem:[%s314 + $0x60] sm:$0xff] %v641
          %658 = vst [vmem:[%s314 + $0x68] sm:$0xff] %v642
          %659 = vst [vmem:[%s314 + $0x70] sm:$0xff] %v643
          %660 = vst [vmem:[%s314 + $0x78] sm:$0xff] %v644
        $region60: #{tpu_custom_call.1} parent=35 // pred_fallthru
          _
        %s661 = sand.u32 %s157, 1
        %s662 = scalar_lea.sflag [#allocation6], %s661
        %s663 = sand.u32 %s157, 1
        %s664 = smul.addr %s663, 128
        %s665 = scalar_lea.vmem [#allocation10], %s664
        // Predicated region
        $region61: #{tpu_custom_call.1} parent=35 // pred_check
          %p666 = pneg %p167
        $region62: #{tpu_custom_call.1} parent=35 // pred_check_branch
          %668 = sbr.rel (%p666) target = $region64
        $region63: #{tpu_custom_call.1} parent=35 // pred_region
          %s669 = smul.u32 16, %s30
          %671 = vsyncadd %s662, 0
          %s672 = smul.addr %s29, 32
          %s673 = sadd.s32 %s669, %s672
          %s674 = smul.addr %s673, 8
          %s675 = scalar_lea.hbm %s4, %s674
          %s676 = sshll.u32 %s665, 4
          %s677 = int_to_ptr.vmem [resolvable:$true] %s676
          %s678 = sshll.u32 %s675, 4
          %s679 = int_to_ptr.hbm [resolvable:$true] %s678
          %684 = dma.vmem_to_hbm [thread:$0]  %s677, 2048, %s679, %s662, 128, 128, 8
        $region64: #{tpu_custom_call.1} parent=35 // pred_fallthru
          _
      $region36: #{tpu_custom_call.1} parent=5 // pred_fallthru
        _
      %p685 = scmp.le.s32.totalorder 2, %s19
      // Predicated region
      $region65: #{tpu_custom_call.1} parent=5 // pred_check
        %p686 = pneg %p685
      $region66: #{tpu_custom_call.1} parent=5 // pred_check_branch
        %688 = sbr.rel (%p686) target = $region68
      $region67: #{tpu_custom_call.1} parent=5 // pred_region
        %s689 = ssub.s32 %s19, 2
        // Predicated region
        $region69: #{tpu_custom_call.1} parent=67 // pred_check
          %p690 = pneg %p173
        $region70: #{tpu_custom_call.1} parent=67 // pred_check_branch
          %692 = sbr.rel (%p690) target = $region72
        $region71: #{tpu_custom_call.1} parent=67 // pred_region
          %s693 = sand.u32 %s158, 1
          %s694 = scalar_lea.sflag [#allocation6], %s693
          %s695 = sand.u32 %s158, 1
          %s696 = smul.addr %s695, 128
          %s697 = scalar_lea.vmem [#allocation10], %s696
          %699 = dma.done %s694, 2048
        $region72: #{tpu_custom_call.1} parent=67 // pred_fallthru
          _
      $region68: #{tpu_custom_call.1} parent=5 // pred_fallthru
        _
    $region6: #{tpu_custom_call.1} parent=1 // loop_footer
      %s23 = sadd.s32 1, %s19
    $region7: #{tpu_custom_call.1} parent=1 // loop_footer_branch
      %18 = sbr.rel target = $region3
    $region8: #{tpu_custom_call.1} parent=1 // loop_exit
      _
    %700 = vsyncpa [#allocation5], 1
    %s701 = scalar_lea.sflag [#allocation5], 1
    %702 = vsyncpa %s701, 1
    %703 = vsyncpa [#allocation8], 1
    %s704 = scalar_lea.sflag [#allocation8], 1
    %705 = vsyncpa %s704, 1
    %706 = vsyncpa [#allocation6], 1
    %s707 = scalar_lea.sflag [#allocation6], 1
    %708 = vsyncpa %s707, 1

</llo_original>
